<compile_context>
chip_gen: v7x
topology: tpu7x:2x2x1
jax: 0.10.0
libtpu: 0.0.40
codegen_flags: <defaults>
</compile_context>

<pallas_src>
import functools

import jax
import jax.numpy as jnp
from jax.experimental import pallas as pl
from jax.experimental.pallas import tpu as pltpu


def _mean_variance_kernel(x_ref, t_ref, mse_ref, var_ref, *,
                          start_age, n_valid, tile_n):
    core = pl.program_id(0)            # TensorCore / parallel-split index
    step = pl.program_id(1)            # tile index within this core
    steps_per_core = pl.num_programs(1)
    gt = core * steps_per_core + step  # unclamped global tile index

    # ---- init this core's resident accumulators on its first step ----------
    @pl.when(step == 0)
    def _init():
        mse_ref[...] = jnp.zeros_like(mse_ref)
        var_ref[...] = jnp.zeros_like(var_ref)

    x = x_ref[...].astype(jnp.float32)          # (tile_n, C) logits (bf16 ok)
    t = t_ref[...].astype(jnp.float32)          # (tile_n, 1) targets
    n_classes = x.shape[1]

    # age vector built in-kernel: a[c] = start_age + c (no HBM input needed)
    ages = (jnp.float32(start_age)
            + jax.lax.broadcasted_iota(jnp.int32, (1, n_classes), 1)
            .astype(jnp.float32))

    # numerically stable softmax numerators; p = e / s is never materialized —
    # per-row sums are normalized with a single exact reciprocal instead.
    x_max = jnp.max(x, axis=1, keepdims=True)
    e = jnp.exp(x - x_max)                                        # (tile_n, C)
    s = jnp.sum(e, axis=1, keepdims=True)                         # (tile_n, 1)
    sa = jnp.sum(e * ages, axis=1, keepdims=True)                 # (tile_n, 1)
    inv_s = pl.reciprocal(s, approx=False)   # exact: keeps the 1e-5 tolerance
    mean = sa * inv_s                                             # E[a] per row
    mse_row = (mean - t) ** 2                                     # (tile_n, 1)
    # variance kept in (a - mean)^2 form for f32 accuracy (no cancellation)
    var_row = jnp.sum(e * (ages - mean) ** 2, axis=1, keepdims=True) * inv_s

    # Mask is only needed on tiles that overlap the ragged tail (or on the
    # duplicated/clamped tiles of an uneven 2-core split); full tiles take the
    # cheap unmasked path.
    needs_mask = (gt + 1) * tile_n > n_valid

    @pl.when(needs_mask)
    def _accumulate_masked():
        row = gt * tile_n + jax.lax.broadcasted_iota(jnp.int32, (tile_n, 1), 0)
        valid = row < n_valid
        mse_ref[...] += jnp.sum(jnp.where(valid, mse_row, 0.0))
        var_ref[...] += jnp.sum(jnp.where(valid, var_row, 0.0))

    @pl.when(jnp.logical_not(needs_mask))
    def _accumulate_full():
        mse_ref[...] += jnp.sum(mse_row)
        var_ref[...] += jnp.sum(var_row)


def mean_variance_loss(logits, target, *, lambda_1, lambda_2, start_age,
                       end_age, tile_n=8192, vmem_limit_bytes=48 * 1024 * 1024):
    """Returns (lambda_1 * mean_loss, lambda_2 * variance_loss) as f32 scalars.

    `logits` may be f32 or bf16 (cast to f32 happens inside the kernel);
    feeding bf16 halves the dominant HBM stream and is the main lever on
    HBM-bound v5e/v6e.  `tile_n` is the batch-row tile (rounded to the dtype's
    sublane multiple and capped by a VMEM budget derived from
    `vmem_limit_bytes`).
    """
    n, n_classes = logits.shape
    assert n_classes == end_age - start_age + 1, \
        "class dim must match the age range"

    limit = vmem_limit_bytes if vmem_limit_bytes is not None else 48 * 1024 * 1024

    # Sublane multiple for the logits dtype: 8 (f32), 16 (bf16), 32 (int8/fp8).
    itemsize = jnp.dtype(logits.dtype).itemsize
    sub = max(8, 32 // itemsize)

    # VMEM budget: both input blocks are lane-padded to 128 lanes in VMEM
    # (logits: C -> 128 lanes; targets: 1 -> 128 lanes!) and double-buffered.
    # Use at most half the scoped-VMEM limit for the pipelined input buffers.
    bytes_per_row = 2 * 128 * (itemsize + 4)
    budget = max(limit // 2, bytes_per_row * sub)
    max_tile = max(sub, (budget // bytes_per_row) // sub * sub)

    tile_n = int(min(int(tile_n), max_tile, pl.cdiv(n, sub) * sub))
    tile_n = max(sub, pl.cdiv(tile_n, sub) * sub)

    n_tiles = pl.cdiv(n, tile_n)            # ragged last block, no wrapper pad
    n_cores = 2 if n_tiles > 1 else 1       # 2-TC split on v7x; free elsewhere
    tiles_per_core = pl.cdiv(n_tiles, n_cores)

    target2d = target.reshape(n, 1)

    def tile_idx(core, i):
        # Clamp so the duplicated trailing tile of an uneven split stays
        # in-bounds; its rows are fully masked out in-kernel.
        return jnp.minimum(core * tiles_per_core + i, n_tiles - 1)

    kernel = functools.partial(
        _mean_variance_kernel,
        start_age=float(start_age), n_valid=n, tile_n=tile_n)

    mse_partials, var_partials = pl.pallas_call(
        kernel,
        out_shape=(
            jax.ShapeDtypeStruct((n_cores, 1, 1), jnp.float32),
            jax.ShapeDtypeStruct((n_cores, 1, 1), jnp.float32),
        ),
        grid_spec=pltpu.PrefetchScalarGridSpec(
            num_scalar_prefetch=0,
            grid=(n_cores, tiles_per_core),
            in_specs=[
                pl.BlockSpec((tile_n, n_classes),
                             lambda c, i: (tile_idx(c, i), 0)),
                pl.BlockSpec((tile_n, 1),
                             lambda c, i: (tile_idx(c, i), 0)),
            ],
            out_specs=[
                pl.BlockSpec((1, 1, 1), lambda c, i: (c, 0, 0)),
                pl.BlockSpec((1, 1, 1), lambda c, i: (c, 0, 0)),
            ]),
        compiler_params=pltpu.CompilerParams(
            dimension_semantics=("parallel", "arbitrary"),
            vmem_limit_bytes=limit),
    )(logits, target2d)

    # Finalize in the wrapper: sum per-core partials, divide by N, apply lambdas.
    inv_n = 1.0 / n
    mean_loss = (float(lambda_1) * 0.5 * inv_n) * jnp.sum(mse_partials)
    var_loss = (float(lambda_2) * inv_n) * jnp.sum(var_partials)
    return mean_loss, var_loss


def _reference(logits, target, *, lambda_1, lambda_2, start_age, end_age):
    p = jax.nn.softmax(logits.astype(jnp.float32), axis=1)
    a = jnp.arange(start_age, end_age + 1, dtype=jnp.float32)
    mean = jnp.sum(p * a[None, :], axis=1)
    mean_loss = jnp.mean((mean - target.astype(jnp.float32)) ** 2) / 2.0
    b = (a[None, :] - mean[:, None]) ** 2
    var_loss = jnp.mean(jnp.sum(p * b, axis=1))
    return lambda_1 * mean_loss, lambda_2 * var_loss


if __name__ == "__main__":
    # MeanVarianceLoss(lambda_1=0.2, lambda_2=0.05, start_age=0, end_age=99)
    lambda_1, lambda_2 = 0.2, 0.05
    start_age, end_age = 0, 99
    C = end_age - start_age + 1  # 100 age classes
    key = jax.random.PRNGKey(0)

    def run_case(n, tile_n, dtype, key):
        kx, kt, key = jax.random.split(key, 3)
        logits = jax.random.normal(kx, (n, C), dtype=jnp.float32).astype(dtype)
        target = jax.random.randint(kt, (n,), start_age,
                                    end_age + 1).astype(jnp.float32)
        m, v = mean_variance_loss(
            logits, target, lambda_1=lambda_1, lambda_2=lambda_2,
            start_age=start_age, end_age=end_age, tile_n=tile_n)
        jax.block_until_ready((m, v))
        m_ref, v_ref = _reference(
            logits, target, lambda_1=lambda_1, lambda_2=lambda_2,
            start_age=start_age, end_age=end_age)
        assert jnp.allclose(m, m_ref, rtol=1e-5, atol=1e-5), (n, dtype, m, m_ref)
        assert jnp.allclose(v, v_ref, rtol=1e-5, atol=1e-5), (n, dtype, v, v_ref)
        return key

    # 1: small batch, single tile, single core, f32 logits
    key = run_case(8, 8192, jnp.float32, key)
    # 2: batch not a tile multiple -> ragged last block + mask, 2-core split
    key = run_case(20, 8, jnp.float32, key)
    # 3: bf16 logits (in-kernel cast); tile rounds 8 -> 16 (bf16 sublane tile)
    key = run_case(24, 8, jnp.bfloat16, key)
    # 4: default tile path, N not a tile multiple, no wrapper pad
    key = run_case(333, 8192, jnp.float32, key)

    print("KERNEL_OK")
</pallas_src>

<mosaic_0001>
module attributes {stable_mosaic.version = 11 : i64} {
  func.func @_mean_variance_kernel(%arg0: i32, %arg1: i32, %arg2: memref<8x100xf32, #tpu.memory_space<vmem>>, %arg3: memref<8x1xf32, #tpu.memory_space<vmem>>, %arg4: memref<1x1x1xf32, #tpu.memory_space<vmem>>, %arg5: memref<1x1x1xf32, #tpu.memory_space<vmem>>) attributes {dimension_semantics = [#tpu.dimension_semantics<parallel>, #tpu.dimension_semantics<arbitrary>], iteration_bounds = array<i64: 1, 1>, scalar_prefetch = 0 : i64, scratch_operands = 0 : i64, tpu.core_type = #tpu.core_type<tc>, window_params = [{transform_indices = @transform_0, window_bounds = array<i64: 8, 100>}, {transform_indices = @transform_1, window_bounds = array<i64: 8, 1>}, {transform_indices = @transform_2, window_bounds = array<i64: 1, 1, 1>}, {transform_indices = @transform_3, window_bounds = array<i64: 1, 1, 1>}]} {
    %c1_i32 = arith.constant 1 : i32
    %0 = arith.muli %arg0, %c1_i32 : i32
    %1 = arith.addi %0, %arg1 : i32
    %c0_i32 = arith.constant 0 : i32
    %2 = arith.cmpi eq, %arg1, %c0_i32 : i32
    %3 = arith.extui %2 : i1 to i32
    %c0_i32_0 = arith.constant 0 : i32
    %4 = arith.cmpi ne, %3, %c0_i32_0 : i32
    scf.if %4 {
      %cst_12 = arith.constant 0.000000e+00 : f32
      %42 = vector.broadcast %cst_12 : f32 to vector<1x1x1xf32>
      %c0_13 = arith.constant 0 : index
      %c0_14 = arith.constant 0 : index
      %c0_15 = arith.constant 0 : index
      %43 = vector.load %arg4[%c0_13, %c0_14, %c0_15] : memref<1x1x1xf32, #tpu.memory_space<vmem>>, vector<1x1x1xf32>
      tpu.vector_store %arg4[%c0_13, %c0_14, %c0_15], %42 {strides = array<i32>} : memref<1x1x1xf32, #tpu.memory_space<vmem>>, vector<1x1x1xf32>,
      %cst_16 = arith.constant 0.000000e+00 : f32
      %44 = vector.broadcast %cst_16 : f32 to vector<1x1x1xf32>
      %c0_17 = arith.constant 0 : index
      %c0_18 = arith.constant 0 : index
      %c0_19 = arith.constant 0 : index
      %45 = vector.load %arg5[%c0_17, %c0_18, %c0_19] : memref<1x1x1xf32, #tpu.memory_space<vmem>>, vector<1x1x1xf32>
      tpu.vector_store %arg5[%c0_17, %c0_18, %c0_19], %44 {strides = array<i32>} : memref<1x1x1xf32, #tpu.memory_space<vmem>>, vector<1x1x1xf32>,
    } else {
    }
    %c0 = arith.constant 0 : index
    %c0_1 = arith.constant 0 : index
    %5 = vector.load %arg2[%c0, %c0_1] : memref<8x100xf32, #tpu.memory_space<vmem>>, vector<8x100xf32>
    %c0_2 = arith.constant 0 : index
    %c0_3 = arith.constant 0 : index
    %6 = vector.load %arg3[%c0_2, %c0_3] : memref<8x1xf32, #tpu.memory_space<vmem>>, vector<8x1xf32>
    %7 = tpu.iota {dimensions = array<i32: 1>} : vector<1x100xi32>
    %8 = arith.sitofp %7 : vector<1x100xi32> to vector<1x100xf32>
    %cst = arith.constant 0.000000e+00 : f32
    %9 = vector.broadcast %cst : f32 to vector<1x100xf32>
    %10 = arith.addf %9, %8 : vector<1x100xf32>
    %cst_4 = arith.constant dense<0xFF800000> : vector<8xf32>
    %11 = vector.multi_reduction <maximumf>, %5, %cst_4 [1] : vector<8x100xf32> to vector<8xf32>
    %12 = vector.shape_cast %11 : vector<8xf32> to vector<8x1xf32>
    %13 = vector.broadcast %12 : vector<8x1xf32> to vector<8x100xf32>
    %14 = arith.subf %5, %13 : vector<8x100xf32>
    %15 = math.exp %14 : vector<8x100xf32>
    %cst_5 = arith.constant dense<0.000000e+00> : vector<8xf32>
    %16 = vector.multi_reduction <add>, %15, %cst_5 [1] : vector<8x100xf32> to vector<8xf32>
    %17 = vector.shape_cast %16 : vector<8xf32> to vector<8x1xf32>
    %18 = vector.broadcast %10 : vector<1x100xf32> to vector<8x100xf32>
    %19 = arith.mulf %15, %18 : vector<8x100xf32>
    %cst_6 = arith.constant dense<0.000000e+00> : vector<8xf32>
    %20 = vector.multi_reduction <add>, %19, %cst_6 [1] : vector<8x100xf32> to vector<8xf32>
    %21 = vector.shape_cast %20 : vector<8xf32> to vector<8x1xf32>
    %22 = tpu.reciprocal %17 : vector<8x1xf32> -> vector<8x1xf32>
    %23 = arith.mulf %21, %22 : vector<8x1xf32>
    %24 = arith.subf %23, %6 : vector<8x1xf32>
    %25 = arith.mulf %24, %24 : vector<8x1xf32>
    %26 = vector.broadcast %10 : vector<1x100xf32> to vector<8x100xf32>
    %27 = vector.broadcast %23 : vector<8x1xf32> to vector<8x100xf32>
    %28 = arith.subf %26, %27 : vector<8x100xf32>
    %29 = arith.mulf %28, %28 : vector<8x100xf32>
    %30 = arith.mulf %15, %29 : vector<8x100xf32>
    %cst_7 = arith.constant dense<0.000000e+00> : vector<8xf32>
    %31 = vector.multi_reduction <add>, %30, %cst_7 [1] : vector<8x100xf32> to vector<8xf32>
    %32 = vector.shape_cast %31 : vector<8xf32> to vector<8x1xf32>
    %33 = arith.mulf %32, %22 : vector<8x1xf32>
    %c1_i32_8 = arith.constant 1 : i32
    %34 = arith.addi %1, %c1_i32_8 : i32
    %c8_i32 = arith.constant 8 : i32
    %35 = arith.muli %34, %c8_i32 : i32
    %c8_i32_9 = arith.constant 8 : i32
    %36 = arith.cmpi sgt, %35, %c8_i32_9 : i32
    %37 = arith.extui %36 : i1 to i32
    %c0_i32_10 = arith.constant 0 : i32
    %38 = arith.cmpi ne, %37, %c0_i32_10 : i32
    scf.if %38 {
      %c8_i32_12 = arith.constant 8 : i32
      %42 = arith.muli %1, %c8_i32_12 : i32
      %43 = tpu.iota {dimensions = array<i32: 0>} : vector<8x1xi32>
      %44 = vector.broadcast %42 : i32 to vector<8x1xi32>
      %45 = arith.addi %44, %43 : vector<8x1xi32>
      %c8_i32_13 = arith.constant 8 : i32
      %46 = vector.broadcast %c8_i32_13 : i32 to vector<8x1xi32>
      %47 = arith.cmpi slt, %45, %46 : vector<8x1xi32>
      %c0_14 = arith.constant 0 : index
      %c0_15 = arith.constant 0 : index
      %c0_16 = arith.constant 0 : index
      %48 = vector.load %arg4[%c0_14, %c0_15, %c0_16] : memref<1x1x1xf32, #tpu.memory_space<vmem>>, vector<1x1x1xf32>
      %cst_17 = arith.constant 0.000000e+00 : f32
      %49 = vector.broadcast %cst_17 : f32 to vector<8x1xf32>
      %50 = arith.select %47, %25, %49 : vector<8x1xi1>, vector<8x1xf32>
      %51 = vector.shape_cast %50 : vector<8x1xf32> to vector<1x8x1xf32>
      %cst_18 = arith.constant dense<0.000000e+00> : vector<1xf32>
      %52 = vector.multi_reduction <add>, %51, %cst_18 [1, 2] : vector<1x8x1xf32> to vector<1xf32>
      %53 = vector.shape_cast %52 : vector<1xf32> to vector<1x1x1xf32>
      %54 = vector.extract %53[0, 0, 0] : f32 from vector<1x1x1xf32>
      %55 = vector.broadcast %54 : f32 to vector<1x1x1xf32>
      %56 = arith.addf %48, %55 : vector<1x1x1xf32>
      %c0_19 = arith.constant 0 : index
      %c0_20 = arith.constant 0 : index
      %c0_21 = arith.constant 0 : index
      %57 = vector.load %arg4[%c0_19, %c0_20, %c0_21] : memref<1x1x1xf32, #tpu.memory_space<vmem>>, vector<1x1x1xf32>
      tpu.vector_store %arg4[%c0_19, %c0_20, %c0_21], %56 {strides = array<i32>} : memref<1x1x1xf32, #tpu.memory_space<vmem>>, vector<1x1x1xf32>,
      %c0_22 = arith.constant 0 : index
      %c0_23 = arith.constant 0 : index
      %c0_24 = arith.constant 0 : index
      %58 = vector.load %arg5[%c0_22, %c0_23, %c0_24] : memref<1x1x1xf32, #tpu.memory_space<vmem>>, vector<1x1x1xf32>
      %cst_25 = arith.constant 0.000000e+00 : f32
      %59 = vector.broadcast %cst_25 : f32 to vector<8x1xf32>
      %60 = arith.select %47, %33, %59 : vector<8x1xi1>, vector<8x1xf32>
      %61 = vector.shape_cast %60 : vector<8x1xf32> to vector<1x8x1xf32>
      %cst_26 = arith.constant dense<0.000000e+00> : vector<1xf32>
      %62 = vector.multi_reduction <add>, %61, %cst_26 [1, 2] : vector<1x8x1xf32> to vector<1xf32>
      %63 = vector.shape_cast %62 : vector<1xf32> to vector<1x1x1xf32>
      %64 = vector.extract %63[0, 0, 0] : f32 from vector<1x1x1xf32>
      %65 = vector.broadcast %64 : f32 to vector<1x1x1xf32>
      %66 = arith.addf %58, %65 : vector<1x1x1xf32>
      %c0_27 = arith.constant 0 : index
      %c0_28 = arith.constant 0 : index
      %c0_29 = arith.constant 0 : index
      %67 = vector.load %arg5[%c0_27, %c0_28, %c0_29] : memref<1x1x1xf32, #tpu.memory_space<vmem>>, vector<1x1x1xf32>
      tpu.vector_store %arg5[%c0_27, %c0_28, %c0_29], %66 {strides = array<i32>} : memref<1x1x1xf32, #tpu.memory_space<vmem>>, vector<1x1x1xf32>,
    } else {
    }
    %true = arith.constant true
    %39 = arith.xori %36, %true : i1
    %40 = arith.extui %39 : i1 to i32
    %c0_i32_11 = arith.constant 0 : i32
    %41 = arith.cmpi ne, %40, %c0_i32_11 : i32
    scf.if %41 {
      %c0_12 = arith.constant 0 : index
      %c0_13 = arith.constant 0 : index
      %c0_14 = arith.constant 0 : index
      %42 = vector.load %arg4[%c0_12, %c0_13, %c0_14] : memref<1x1x1xf32, #tpu.memory_space<vmem>>, vector<1x1x1xf32>
      %43 = vector.shape_cast %25 : vector<8x1xf32> to vector<1x8x1xf32>
      %cst_15 = arith.constant dense<0.000000e+00> : vector<1xf32>
      %44 = vector.multi_reduction <add>, %43, %cst_15 [1, 2] : vector<1x8x1xf32> to vector<1xf32>
      %45 = vector.shape_cast %44 : vector<1xf32> to vector<1x1x1xf32>
      %46 = vector.extract %45[0, 0, 0] : f32 from vector<1x1x1xf32>
      %47 = vector.broadcast %46 : f32 to vector<1x1x1xf32>
      %48 = arith.addf %42, %47 : vector<1x1x1xf32>
      %c0_16 = arith.constant 0 : index
      %c0_17 = arith.constant 0 : index
      %c0_18 = arith.constant 0 : index
      %49 = vector.load %arg4[%c0_16, %c0_17, %c0_18] : memref<1x1x1xf32, #tpu.memory_space<vmem>>, vector<1x1x1xf32>
      tpu.vector_store %arg4[%c0_16, %c0_17, %c0_18], %48 {strides = array<i32>} : memref<1x1x1xf32, #tpu.memory_space<vmem>>, vector<1x1x1xf32>,
      %c0_19 = arith.constant 0 : index
      %c0_20 = arith.constant 0 : index
      %c0_21 = arith.constant 0 : index
      %50 = vector.load %arg5[%c0_19, %c0_20, %c0_21] : memref<1x1x1xf32, #tpu.memory_space<vmem>>, vector<1x1x1xf32>
      %51 = vector.shape_cast %33 : vector<8x1xf32> to vector<1x8x1xf32>
      %cst_22 = arith.constant dense<0.000000e+00> : vector<1xf32>
      %52 = vector.multi_reduction <add>, %51, %cst_22 [1, 2] : vector<1x8x1xf32> to vector<1xf32>
      %53 = vector.shape_cast %52 : vector<1xf32> to vector<1x1x1xf32>
      %54 = vector.extract %53[0, 0, 0] : f32 from vector<1x1x1xf32>
      %55 = vector.broadcast %54 : f32 to vector<1x1x1xf32>
      %56 = arith.addf %50, %55 : vector<1x1x1xf32>
      %c0_23 = arith.constant 0 : index
      %c0_24 = arith.constant 0 : index
      %c0_25 = arith.constant 0 : index
      %57 = vector.load %arg5[%c0_23, %c0_24, %c0_25] : memref<1x1x1xf32, #tpu.memory_space<vmem>>, vector<1x1x1xf32>
      tpu.vector_store %arg5[%c0_23, %c0_24, %c0_25], %56 {strides = array<i32>} : memref<1x1x1xf32, #tpu.memory_space<vmem>>, vector<1x1x1xf32>,
    } else {
    }
    return
  }
  func.func @transform_0(%arg0: i32, %arg1: i32) -> (i32, i32) {
    %c1_i32 = arith.constant 1 : i32
    %0 = arith.muli %arg0, %c1_i32 : i32
    %1 = arith.addi %0, %arg1 : i32
    %c0_i32 = arith.constant 0 : i32
    %2 = arith.minsi %1, %c0_i32 : i32
    %c0_i32_0 = arith.constant 0 : i32
    %c0_i32_1 = arith.constant 0 : i32
    return %2, %c0_i32_0 : i32, i32
  }
  func.func @transform_1(%arg0: i32, %arg1: i32) -> (i32, i32) {
    %c1_i32 = arith.constant 1 : i32
    %0 = arith.muli %arg0, %c1_i32 : i32
    %1 = arith.addi %0, %arg1 : i32
    %c0_i32 = arith.constant 0 : i32
    %2 = arith.minsi %1, %c0_i32 : i32
    %c0_i32_0 = arith.constant 0 : i32
    %c0_i32_1 = arith.constant 0 : i32
    return %2, %c0_i32_0 : i32, i32
  }
  func.func @transform_2(%arg0: i32, %arg1: i32) -> (i32, i32, i32) {
    %c0_i32 = arith.constant 0 : i32
    %c0_i32_0 = arith.constant 0 : i32
    %c0_i32_1 = arith.constant 0 : i32
    return %arg0, %c0_i32, %c0_i32_0 : i32, i32, i32
  }
  func.func @transform_3(%arg0: i32, %arg1: i32) -> (i32, i32, i32) {
    %c0_i32 = arith.constant 0 : i32
    %c0_i32_0 = arith.constant 0 : i32
    %c0_i32_1 = arith.constant 0 : i32
    return %arg0, %c0_i32, %c0_i32_0 : i32, i32, i32
  }
}

</mosaic_0001>

<llo_original>
// kernel: tpu_custom_call.1
$region0: #{tpu_custom_call.1}
  #allocation0 [shape = 'u32[]', space=smem, size = 0x4, offset = 0x4, fixed_abs, tag = 'smem constant byte address 0x4 - core index']
  #allocation1 [shape = 'u32[144,128]{1,0:T(1,128)}', space=vmem, size = 0x12000, scoped, tag = 'internal scratch']
  %s0 = inlined_call_operand.vmem [shape: f32[8,100], index: 0, kind: input, shape index: {}]
  %s1 = inlined_call_operand.vmem [shape: f32[8,1], index: 1, kind: input, shape index: {}]
  %s2 = inlined_call_operand.hbm [shape: f32[1,1,1], index: 2, kind: output, shape index: {0}]
  %s3 = inlined_call_operand.hbm [shape: f32[1,1,1], index: 3, kind: output, shape index: {1}]
  %4 = xla_tuple %s2, %s3
  %s5 = sld [smem:[#allocation0]]
  $region38: #{tpu_custom_call.1} parent=0
    _
  %s7 = ssub.s32 1, %s5
  %s8 = scalar_select 0, %s7, %s5
  $region1: #{tpu_custom_call.1} parent=0
    #allocation2 [shape = 'u8[512]{0}', space=vmem, size = 0x400, scoped, tag = 'output window, operand 0, single buffered']
    #allocation3 [shape = 's32[1]{0}', space=sflag, size = 0x4, scoped, tag = 'scoped memory for tpu_custom_call.1']
    #allocation4 [shape = 'u8[512]{0}', space=vmem, size = 0x400, scoped, tag = 'output window, operand 1, single buffered']
    #allocation5 [shape = 's32[1]{0}', space=sflag, size = 0x4, scoped, tag = 'scoped memory for tpu_custom_call.1']
    %9 = vsyncpa [#allocation3], 0
    %10 = vsyncpa [#allocation5], 0
    // Predicated region
    $region2: #{tpu_custom_call.1} parent=1 // pred_check
      _
    $region3: #{tpu_custom_call.1} parent=1 // pred_check_branch
      %12 = sbr.rel (0) target = $region5
    $region4: #{tpu_custom_call.1} parent=1 // pred_region
      %s13 = sadd.s32 0, 0
      %p14 = scmp.lt.s32.totalorder %s13, 0
      %s15 = scalar_select %p14, %s13, 0
      %p16 = scmp.lt.s32.totalorder %s15, 0
      %s17 = scalar_select %p16, %s15, 0
      %s18 = smul.addr %s17, 8
      %s19 = scalar_lea.vmem %s0, %s18
      %s20 = sadd.s32 0, 0
      %p21 = scmp.lt.s32.totalorder %s20, 0
      %s22 = scalar_select %p21, %s20, 0
    $region5: #{tpu_custom_call.1} parent=1 // pred_fallthru
      _
    // Predicated region
    $region6: #{tpu_custom_call.1} parent=1 // pred_check
      _
    $region7: #{tpu_custom_call.1} parent=1 // pred_check_branch
      %24 = sbr.rel (0) target = $region9
    $region8: #{tpu_custom_call.1} parent=1 // pred_region
      %s25 = sadd.s32 0, 0
      %p26 = scmp.lt.s32.totalorder %s25, 0
      %s27 = scalar_select %p26, %s25, 0
      %p28 = scmp.lt.s32.totalorder %s27, 0
      %s29 = scalar_select %p28, %s27, 0
      %s30 = smul.addr %s29, 8
      %s31 = scalar_lea.vmem %s1, %s30
      %s32 = sadd.s32 0, 0
      %p33 = scmp.lt.s32.totalorder %s32, 0
      %s34 = scalar_select %p33, %s32, 0
    $region9: #{tpu_custom_call.1} parent=1 // pred_fallthru
      _
    %s35 = sadd.s32 0, 0
    %p36 = scmp.lt.s32.totalorder %s35, 0
    %s37 = scalar_select %p36, %s35, 0
    %p38 = scmp.lt.s32.totalorder %s37, 0
    %s39 = scalar_select %p38, %s37, 0
    %s40 = smul.addr %s39, 8
    %s41 = scalar_lea.vmem %s0, %s40
    %s42 = sadd.s32 0, 0
    %p43 = scmp.lt.s32.totalorder %s42, 0
    %s44 = scalar_select %p43, %s42, 0
    %p45 = scmp.lt.s32.totalorder %s44, 0
    %s46 = scalar_select %p45, %s44, 0
    %s47 = smul.addr %s46, 8
    %s48 = scalar_lea.vmem %s1, %s47
    %s49 = sadd.s32 0, 0
    %p50 = scmp.lt.s32.totalorder %s49, 0
    %s51 = scalar_select %p50, %s49, 0
    %p52 = scmp.lt.s32.totalorder %s51, 0
    %s53 = scalar_select %p52, %s51, 0
    %s54 = smul.addr %s53, 8
    %s55 = scalar_lea.vmem %s0, %s54
    %s56 = sadd.s32 0, 0
    %p57 = scmp.lt.s32.totalorder %s56, 0
    %s58 = scalar_select %p57, %s56, 0
    %s59 = sadd.s32 0, 0
    %p60 = scmp.lt.s32.totalorder %s59, 0
    %s61 = scalar_select %p60, %s59, 0
    %p62 = scmp.lt.s32.totalorder %s61, 0
    %s63 = scalar_select %p62, %s61, 0
    %s64 = smul.addr %s63, 8
    %s65 = scalar_lea.vmem %s1, %s64
    %s66 = sadd.s32 0, 0
    %p67 = scmp.lt.s32.totalorder %s66, 0
    %s68 = scalar_select %p67, %s66, 0
    %s69 = sadd.s32 0, 0
    %p70 = scmp.eq.s32.totalorder 0, 0
    // Predicated region
    $region10: #{tpu_custom_call.1} parent=1 // pred_check
      %p71 = pneg %p70
    $region11: #{tpu_custom_call.1} parent=1 // pred_check_branch
      %73 = sbr.rel (%p71) target = $region13
    $region12: #{tpu_custom_call.1} parent=1 // pred_region
      %vm74 = vcmask 0
      %75 = vst.msk [vmem:[#allocation2] sm:$0x1] %vm74, 0.0
      %76 = vst.msk [vmem:[#allocation4] sm:$0x1] %vm74, 0.0
    $region13: #{tpu_custom_call.1} parent=1 // pred_fallthru
      _
    %v77 = vld [vmem:[%s55] sm:$0xff]
    %v78 = vld [vmem:[%s65] sm:$0xff]
    %v79 = vlaneseq
    %v80 = vand.u32 %v79, 127
    %v81 = vcvt.s32.f32 %v80
    %v82 = vadd.f32 %v81, 0.0
    %vm83 = vcmask 818176
    %v84 = vsel %vm83, %v77, -inf
    %85 = vmax.xlane.f32.xlu0 %v84
    %v86 = vpop.xlane.xlu0 %85
    %v87 = vsub.f32 %v77, %v86
    %v88 = vmul.f32 %v87, 1.442695
    %v89 = vpow.pop %v88
    %v90 = vsel %vm83, %v89, 0.0
    %91 = vadd.xlane.f32.xlu0 %v90
    %v92 = vpop.xlane.xlu0 %91
    %v93 = vmul.f32 %v89, %v82
    %v94 = vsel %vm83, %v93, 0.0
    %95 = vadd.xlane.f32.xlu0 %v94
    %v96 = vpop.xlane.xlu0 %95
    %v97 = vrcp.pop %v92
    %v98 = vmul.f32 %v96, %v97
    %v99 = vsub.f32 %v98, %v78
    %v100 = vmul.f32 %v99, %v99
    %v101 = vsub.f32 %v82, %v98
    %v102 = vmul.f32 %v101, %v101
    %v103 = vmul.f32 %v89, %v102
    %v104 = vsel %vm83, %v103, 0.0
    %105 = vadd.xlane.f32.xlu0 %v104
    %v106 = vpop.xlane.xlu0 %105
    %v107 = vmul.f32 %v106, %v97
    %s108 = sadd.s32 %s69, 1
    %s109 = smul.u32 %s108, 8
    %p110 = scmp.gt.s32.totalorder %s109, 8
    // Predicated region
    $region14: #{tpu_custom_call.1} parent=1 // pred_check
      %p111 = pneg %p110
    $region15: #{tpu_custom_call.1} parent=1 // pred_check_branch
      %113 = sbr.rel (%p111) target = $region17
    $region16: #{tpu_custom_call.1} parent=1 // pred_region
      %s114 = smul.u32 %s69, 8
      %v115 = vlaneseq
      %v116 = vshrl.u32 %v115, 7
      %v117 = vstv %s114
      %v118 = vadd.s32 %v117, %v116
      %vm119 = vcmp.lt.s32.totalorder %v118, 8
      %v120 = vld [vmem:[#allocation2] sm:$0x1]
      %v121 = vsel %vm119, %v100, 0.0
      %vm122 = vcmask 7168
      %v123 = vsel %vm122, %v121, 0.0
      %124 = vadd.xlane.f32.xlu0 %v123
      %v125 = vpop.xlane.xlu0 %124
      %v126 = vrot.slane %v125, 4
      %v127 = vadd.f32 %v125, %v126
      %v128 = vrot.slane %v127, 2
      %v129 = vadd.f32 %v127, %v128
      %v130 = vrot.slane %v129, 1
      %v131 = vadd.f32 %v129, %v130
      %s132 = vtos %v131
      %v133 = vstv %s132
      %v134 = vadd.f32 %v120, %v133
      %vm135 = vcmask 0
      %136 = vst.msk [vmem:[#allocation2] sm:$0x1] %vm135, %v134
      %v137 = vld [vmem:[#allocation4] sm:$0x1]
      %v138 = vsel %vm119, %v107, 0.0
      %v139 = vsel %vm122, %v138, 0.0
      %140 = vadd.xlane.f32.xlu0 %v139
      %v141 = vpop.xlane.xlu0 %140
      %v142 = vrot.slane %v141, 4
      %v143 = vadd.f32 %v141, %v142
      %v144 = vrot.slane %v143, 2
      %v145 = vadd.f32 %v143, %v144
      %v146 = vrot.slane %v145, 1
      %v147 = vadd.f32 %v145, %v146
      %s148 = vtos %v147
      %v149 = vstv %s148
      %v150 = vadd.f32 %v137, %v149
      %151 = vst.msk [vmem:[#allocation4] sm:$0x1] %vm135, %v150
    $region17: #{tpu_custom_call.1} parent=1 // pred_fallthru
      _
    %p152 = scmp.le.s32.totalorder %s109, 8
    // Predicated region
    $region18: #{tpu_custom_call.1} parent=1 // pred_check
      %p153 = pneg %p152
    $region19: #{tpu_custom_call.1} parent=1 // pred_check_branch
      %155 = sbr.rel (%p153) target = $region21
    $region20: #{tpu_custom_call.1} parent=1 // pred_region
      %v156 = vld [vmem:[#allocation2] sm:$0x1]
      %vm157 = vcmask 7168
      %v158 = vsel %vm157, %v100, 0.0
      %159 = vadd.xlane.f32.xlu0 %v158
      %v160 = vpop.xlane.xlu0 %159
      %v161 = vrot.slane %v160, 4
      %v162 = vadd.f32 %v160, %v161
      %v163 = vrot.slane %v162, 2
      %v164 = vadd.f32 %v162, %v163
      %v165 = vrot.slane %v164, 1
      %v166 = vadd.f32 %v164, %v165
      %s167 = vtos %v166
      %v168 = vstv %s167
      %v169 = vadd.f32 %v156, %v168
      %vm170 = vcmask 0
      %171 = vst.msk [vmem:[#allocation2] sm:$0x1] %vm170, %v169
      %v172 = vld [vmem:[#allocation4] sm:$0x1]
      %v173 = vsel %vm157, %v107, 0.0
      %174 = vadd.xlane.f32.xlu0 %v173
      %v175 = vpop.xlane.xlu0 %174
      %v176 = vrot.slane %v175, 4
      %v177 = vadd.f32 %v175, %v176
      %v178 = vrot.slane %v177, 2
      %v179 = vadd.f32 %v177, %v178
      %v180 = vrot.slane %v179, 1
      %v181 = vadd.f32 %v179, %v180
      %s182 = vtos %v181
      %v183 = vstv %s182
      %v184 = vadd.f32 %v172, %v183
      %185 = vst.msk [vmem:[#allocation4] sm:$0x1] %vm170, %v184
    $region21: #{tpu_custom_call.1} parent=1 // pred_fallthru
      _
    // Predicated region
    $region22: #{tpu_custom_call.1} parent=1 // pred_check
      _
    $region23: #{tpu_custom_call.1} parent=1 // pred_check_branch
      %187 = sbr.rel (0) target = $region25
    $region24: #{tpu_custom_call.1} parent=1 // pred_region
      %s189 = ssub.s32 16, 16
      %190 = vsyncadd [#allocation3], %s189
      %s192 = sshll.u32 [#allocation2], 4
      %s193 = int_to_ptr.vmem [resolvable:$true] %s192
      %195 = dma.vmem_to_hbm [thread:$0]  %s193, 16, %s2, [#allocation3]
    $region25: #{tpu_custom_call.1} parent=1 // pred_fallthru
      _
    // Predicated region
    $region26: #{tpu_custom_call.1} parent=1 // pred_check
      _
    $region27: #{tpu_custom_call.1} parent=1 // pred_check_branch
      %197 = sbr.rel (0) target = $region29
    $region28: #{tpu_custom_call.1} parent=1 // pred_region
      %s199 = ssub.s32 16, 16
      %200 = vsyncadd [#allocation5], %s199
      %s202 = sshll.u32 [#allocation4], 4
      %s203 = int_to_ptr.vmem [resolvable:$true] %s202
      %205 = dma.vmem_to_hbm [thread:$0]  %s203, 16, %s3, [#allocation5]
    $region29: #{tpu_custom_call.1} parent=1 // pred_fallthru
      _
    // Predicated region
    $region30: #{tpu_custom_call.1} parent=1 // pred_check
      _
    $region31: #{tpu_custom_call.1} parent=1 // pred_check_branch
      %207 = sbr.rel (0) target = $region33
    $region32: #{tpu_custom_call.1} parent=1 // pred_region
      %208 = dma.done [#allocation3], 16
    $region33: #{tpu_custom_call.1} parent=1 // pred_fallthru
      _
    // Predicated region
    $region34: #{tpu_custom_call.1} parent=1 // pred_check
      _
    $region35: #{tpu_custom_call.1} parent=1 // pred_check_branch
      %210 = sbr.rel (0) target = $region37
    $region36: #{tpu_custom_call.1} parent=1 // pred_region
      %211 = dma.done [#allocation5], 16
    $region37: #{tpu_custom_call.1} parent=1 // pred_fallthru
      _
    %212 = vsyncpa [#allocation3], 1
    %213 = vsyncpa [#allocation5], 1

</llo_original>
